<compile_context>
chip_gen: v6e
topology: v6e:2x2x1
jax: 0.10.0
libtpu: 0.0.40
codegen_flags: <defaults>
</compile_context>

<pallas_src>
import functools

import jax
import jax.numpy as jnp
from jax.experimental import pallas as pl
from jax.experimental.pallas import tpu as pltpu


def _critic_kernel(xt_ref, w1_ref, b1_ref, w2_ref, b2_ref, w3_ref, b3_ref, q_ref):
    """One batch tile of the 3-layer MLP; batch lives on the lane axis.

    xt_ref : (d_in, tile)  bf16   inputs, transposed (lane = batch)
    w1_ref : (h, d_in)     bf16   fc1.weight (PyTorch (out, in) layout)
    b1_ref : (h, 1)        f32
    w2_ref : (h, h)        bf16   fc2.weight
    b2_ref : (h, 1)        f32
    w3_ref : (h, 1)        f32    fc3.weight^T (column)
    b3_ref : (1,)          f32    scalar in SMEM
    q_ref  : (1, tile)     f32    lane-dense output row
    """
    x = xt_ref[...]                                          # (d_in, tile) bf16

    # fc1 + ReLU : (h, d_in) @ (d_in, tile) -> (h, tile), f32 MXU accumulation.
    h1 = jnp.dot(w1_ref[...], x, preferred_element_type=jnp.float32)
    h1 = jnp.maximum(h1 + b1_ref[...], 0.0)

    # fc2 + ReLU : (h, h) @ (h, tile) -> (h, tile).
    h2 = jnp.dot(w2_ref[...], h1.astype(w2_ref.dtype),
                 preferred_element_type=jnp.float32)
    h2 = jnp.maximum(h2 + b2_ref[...], 0.0)

    # fc3: output width 1 -> skip the MXU. VPU multiply + sublane (XLU)
    # reduction, all in f32; overlaps with the MXU work of other tiles.
    q = jnp.sum(h2 * w3_ref[...], axis=0, keepdims=True) + b3_ref[0]  # (1, tile)

    q_ref[...] = q.astype(q_ref.dtype)


def _pick_batch_tile(batch):
    """Lane-dense, MXU-aligned batch tile (multiple of 256, capped at 2048).

    For larger batches aim for >=2 grid steps so the x-tile DMA pipelines and
    the "parallel" batch axis can shard across v7x's two TensorCores.
    """
    if batch <= 256:
        return 256
    tile = 256 * pl.cdiv(batch, 512)       # ~batch/2, rounded up to 256
    return int(min(2048, tile))


@functools.partial(jax.jit, static_argnames=("batch_tile",))
def critic_forward(x, params, *, batch_tile=None):
    """x: [B, input_shape] (f32) -> q: [B, 1] (f32)."""
    w1, b1, w2, b2, w3, b3 = params
    B, d_in = x.shape
    h = w1.shape[0]

    if batch_tile is None:
        batch_tile = _pick_batch_tile(B)
    n_tiles = pl.cdiv(B, batch_tile)
    b_pad = n_tiles * batch_tile

    # Batch onto the lane axis: a single (B, d_in) -> (d_in, B) transpose plus
    # bf16 cast in the wrapper keeps every in-kernel activation lane-dense.
    xt = jnp.transpose(x).astype(jnp.bfloat16)
    if b_pad != B:
        xt = jnp.pad(xt, ((0, 0), (0, b_pad - B)))

    w1_bf = w1.astype(jnp.bfloat16)
    w2_bf = w2.astype(jnp.bfloat16)

    flops = int(2 * b_pad * (d_in * h + h * h + h))
    bytes_accessed = int(
        xt.size * 2 + w1.size * 2 + w2.size * 2
        + (b1.size + b2.size + w3.size + b3.size) * 4
        + b_pad * 4)

    in_specs = [
        pl.BlockSpec((d_in, batch_tile), lambda i: (0, i)),   # x^T batch tile
        pl.BlockSpec((h, d_in), lambda i: (0, 0)),            # W1 (VMEM resident)
        pl.BlockSpec((h, 1), lambda i: (0, 0)),               # b1
        pl.BlockSpec((h, h), lambda i: (0, 0)),               # W2 (VMEM resident)
        pl.BlockSpec((h, 1), lambda i: (0, 0)),               # b2
        pl.BlockSpec((h, 1), lambda i: (0, 0)),                # W3 column
        pl.BlockSpec(memory_space=pltpu.MemorySpace.SMEM),     # b3 scalar
    ]
    # Lane-dense output: a (1, B_pad) row, tiled (1, batch_tile) along lanes.
    out_specs = pl.BlockSpec((1, batch_tile), lambda i: (0, i))

    out = pl.pallas_call(
        _critic_kernel,
        out_shape=jax.ShapeDtypeStruct((1, b_pad), jnp.float32),
        grid_spec=pltpu.PrefetchScalarGridSpec(
            num_scalar_prefetch=0,
            grid=(n_tiles,),
            in_specs=in_specs,
            out_specs=out_specs,
        ),
        compiler_params=pltpu.CompilerParams(
            # Independent batch tiles -> shardable across v7x's TensorCores.
            dimension_semantics=("parallel",),
        ),
        cost_estimate=pl.CostEstimate(
            flops=flops, transcendentals=0, bytes_accessed=bytes_accessed),
    )(xt, w1_bf, b1, w2_bf, b2, w3, b3)

    return out[0, :B].reshape(B, 1)


def init_critic_params(key, input_shape, critic_dim):
    """PyTorch nn.Linear init: U(-1/sqrt(fan_in), 1/sqrt(fan_in)).

    Weights are stored in PyTorch (out, in) layout (the kernel computes
    W @ x^T, so no transposes are needed); b1/b2 are (h, 1) columns that
    broadcast over the lane (batch) axis; fc3 weight is an (h, 1) column and
    b3 a (1,) scalar.
    """
    def linear(key, fan_in, fan_out):
        kw, kb = jax.random.split(key)
        bound = 1.0 / jnp.sqrt(fan_in)
        w = jax.random.uniform(kw, (fan_out, fan_in), jnp.float32, -bound, bound)
        b = jax.random.uniform(kb, (fan_out,), jnp.float32, -bound, bound)
        return w, b

    k1, k2, k3 = jax.random.split(key, 3)
    w1, b1 = linear(k1, input_shape, critic_dim)
    w2, b2 = linear(k2, critic_dim, critic_dim)
    w3, b3 = linear(k3, critic_dim, 1)
    return (w1, b1[:, None], w2, b2[:, None], w3.T, b3)


def critic_reference_f32(x, params):
    """Pure-JAX f32 reference matching the PyTorch module exactly."""
    w1, b1, w2, b2, w3, b3 = params
    h1 = jnp.maximum(x @ w1.T + b1[:, 0], 0.0)
    h2 = jnp.maximum(h1 @ w2.T + b2[:, 0], 0.0)
    return h2 @ w3 + b3[None, :]


def critic_reference_bf16(x, params):
    """Reference with the same bf16-operand / f32-accumulation numerics as the kernel."""
    w1, b1, w2, b2, w3, b3 = params
    xb = x.astype(jnp.bfloat16)
    h1 = jnp.dot(xb, w1.astype(jnp.bfloat16).T, preferred_element_type=jnp.float32)
    h1 = jnp.maximum(h1 + b1[:, 0], 0.0)
    h2 = jnp.dot(h1.astype(jnp.bfloat16), w2.astype(jnp.bfloat16).T,
                 preferred_element_type=jnp.float32)
    h2 = jnp.maximum(h2 + b2[:, 0], 0.0)
    return h2 @ w3 + b3[None, :]


if __name__ == "__main__":
    # Shapes consistent with the module: input_shape=32, critic_dim=64.
    input_shape = 32
    critic_dim = 64

    key = jax.random.PRNGKey(0)
    kx, kp, kx2 = jax.random.split(key, 3)
    params = init_critic_params(kp, input_shape, critic_dim)

    # Main case: B=512 -> auto tile 256, two "parallel" grid steps.
    B = 512
    x = jax.random.normal(kx, (B, input_shape), dtype=jnp.float32)
    q = jax.block_until_ready(critic_forward(x, params))
    assert q.shape == (B, 1)
    # Tight check vs a reference with identical bf16/f32 numerics.
    q_bf = critic_reference_bf16(x, params)
    assert jnp.allclose(q, q_bf, atol=1e-3, rtol=1e-3), "mismatch vs bf16 reference (B=512)"
    # Loose sanity check vs the pure-f32 PyTorch-equivalent reference
    # (difference is solely the bf16 cast of the matmul operands).
    q_f32 = critic_reference_f32(x, params)
    assert jnp.allclose(q, q_f32, atol=5e-2, rtol=5e-2), "mismatch vs f32 reference (B=512)"

    # Ragged-batch case: exercises the pad-to-tile path (tile=256, 1 step).
    B2 = 40
    x2 = jax.random.normal(kx2, (B2, input_shape), dtype=jnp.float32)
    q2 = jax.block_until_ready(critic_forward(x2, params))
    assert q2.shape == (B2, 1)
    q2_bf = critic_reference_bf16(x2, params)
    assert jnp.allclose(q2, q2_bf, atol=1e-3, rtol=1e-3), "mismatch vs bf16 reference (B=40)"
    q2_f32 = critic_reference_f32(x2, params)
    assert jnp.allclose(q2, q2_f32, atol=5e-2, rtol=5e-2), "mismatch vs f32 reference (B=40)"

    print("KERNEL_OK")
</pallas_src>

<mosaic_0001>
module attributes {stable_mosaic.version = 11 : i64} {
  func.func @_critic_kernel(%arg0: i32, %arg1: memref<32x256xbf16, #tpu.memory_space<vmem>>, %arg2: memref<64x32xbf16, #tpu.memory_space<vmem>>, %arg3: memref<64x1xf32, #tpu.memory_space<vmem>>, %arg4: memref<64x64xbf16, #tpu.memory_space<vmem>>, %arg5: memref<64x1xf32, #tpu.memory_space<vmem>>, %arg6: memref<64x1xf32, #tpu.memory_space<vmem>>, %arg7: memref<1xf32, #tpu.memory_space<smem>>, %arg8: memref<1x256xf32, #tpu.memory_space<vmem>>) attributes {dimension_semantics = [#tpu.dimension_semantics<parallel>], iteration_bounds = array<i64: 2>, scalar_prefetch = 0 : i64, scratch_operands = 0 : i64, tpu.core_type = #tpu.core_type<tc>, window_params = [{transform_indices = @transform_0, window_bounds = array<i64: 32, 256>}, {pipeline_mode = #tpu.pipeline_mode<synchronous>, transform_indices = @transform_1, window_bounds = array<i64: 64, 32>}, {pipeline_mode = #tpu.pipeline_mode<synchronous>, transform_indices = @transform_2, window_bounds = array<i64: 64, 1>}, {pipeline_mode = #tpu.pipeline_mode<synchronous>, transform_indices = @transform_3, window_bounds = array<i64: 64, 64>}, {pipeline_mode = #tpu.pipeline_mode<synchronous>, transform_indices = @transform_4, window_bounds = array<i64: 64, 1>}, {pipeline_mode = #tpu.pipeline_mode<synchronous>, transform_indices = @transform_5, window_bounds = array<i64: 64, 1>}, {transform_indices = @transform_6, window_bounds = array<i64: 1>}, {transform_indices = @transform_7, window_bounds = array<i64: 1, 256>}]} {
    %c0 = arith.constant 0 : index
    %c0_0 = arith.constant 0 : index
    %0 = vector.load %arg1[%c0, %c0_0] : memref<32x256xbf16, #tpu.memory_space<vmem>>, vector<32x256xbf16>
    %c0_1 = arith.constant 0 : index
    %c0_2 = arith.constant 0 : index
    %1 = vector.load %arg2[%c0_1, %c0_2] : memref<64x32xbf16, #tpu.memory_space<vmem>>, vector<64x32xbf16>
    %cst = arith.constant dense<0.000000e+00> : vector<64x256xf32>
    %2 = tpu.matmul %1, %0, %cst {dimension_numbers = #tpu.dot_dimension_numbers<[1], [0], [0], [1], [0, 0, 1, 1], [], []>} : vector<64x32xbf16>, vector<32x256xbf16>, vector<64x256xf32> -> vector<64x256xf32>
    %c0_3 = arith.constant 0 : index
    %c0_4 = arith.constant 0 : index
    %3 = vector.load %arg3[%c0_3, %c0_4] : memref<64x1xf32, #tpu.memory_space<vmem>>, vector<64x1xf32>
    %4 = vector.broadcast %3 : vector<64x1xf32> to vector<64x256xf32>
    %5 = arith.addf %2, %4 : vector<64x256xf32>
    %cst_5 = arith.constant 0.000000e+00 : f32
    %6 = vector.broadcast %cst_5 : f32 to vector<64x256xf32>
    %7 = arith.maximumf %5, %6 : vector<64x256xf32>
    %c0_6 = arith.constant 0 : index
    %c0_7 = arith.constant 0 : index
    %8 = vector.load %arg4[%c0_6, %c0_7] : memref<64x64xbf16, #tpu.memory_space<vmem>>, vector<64x64xbf16>
    %9 = arith.truncf %7 : vector<64x256xf32> to vector<64x256xbf16>
    %cst_8 = arith.constant dense<0.000000e+00> : vector<64x256xf32>
    %10 = tpu.matmul %8, %9, %cst_8 {dimension_numbers = #tpu.dot_dimension_numbers<[1], [0], [0], [1], [0, 0, 1, 1], [], []>} : vector<64x64xbf16>, vector<64x256xbf16>, vector<64x256xf32> -> vector<64x256xf32>
    %c0_9 = arith.constant 0 : index
    %c0_10 = arith.constant 0 : index
    %11 = vector.load %arg5[%c0_9, %c0_10] : memref<64x1xf32, #tpu.memory_space<vmem>>, vector<64x1xf32>
    %12 = vector.broadcast %11 : vector<64x1xf32> to vector<64x256xf32>
    %13 = arith.addf %10, %12 : vector<64x256xf32>
    %cst_11 = arith.constant 0.000000e+00 : f32
    %14 = vector.broadcast %cst_11 : f32 to vector<64x256xf32>
    %15 = arith.maximumf %13, %14 : vector<64x256xf32>
    %c0_12 = arith.constant 0 : index
    %c0_13 = arith.constant 0 : index
    %16 = vector.load %arg6[%c0_12, %c0_13] : memref<64x1xf32, #tpu.memory_space<vmem>>, vector<64x1xf32>
    %17 = vector.broadcast %16 : vector<64x1xf32> to vector<64x256xf32>
    %18 = arith.mulf %15, %17 : vector<64x256xf32>
    %cst_14 = arith.constant dense<0.000000e+00> : vector<256xf32>
    %19 = vector.multi_reduction <add>, %18, %cst_14 [0] : vector<64x256xf32> to vector<256xf32>
    %20 = vector.shape_cast %19 : vector<256xf32> to vector<1x256xf32>
    %c0_15 = arith.constant 0 : index
    %21 = memref.load %arg7[%c0_15] : memref<1xf32, #tpu.memory_space<smem>>
    %22 = vector.broadcast %21 : f32 to vector<1x256xf32>
    %23 = arith.addf %20, %22 : vector<1x256xf32>
    %c0_16 = arith.constant 0 : index
    %c0_17 = arith.constant 0 : index
    %24 = vector.load %arg8[%c0_16, %c0_17] : memref<1x256xf32, #tpu.memory_space<vmem>>, vector<1x256xf32>
    tpu.vector_store %arg8[%c0_16, %c0_17], %23 {strides = array<i32>} : memref<1x256xf32, #tpu.memory_space<vmem>>, vector<1x256xf32>,
    return
  }
  func.func @transform_0(%arg0: i32) -> (i32, i32) {
    %c0_i32 = arith.constant 0 : i32
    %c0_i32_0 = arith.constant 0 : i32
    return %c0_i32, %arg0 : i32, i32
  }
  func.func @transform_1(%arg0: i32) -> (i32, i32) {
    %c0_i32 = arith.constant 0 : i32
    %c0_i32_0 = arith.constant 0 : i32
    %c0_i32_1 = arith.constant 0 : i32
    return %c0_i32, %c0_i32_0 : i32, i32
  }
  func.func @transform_2(%arg0: i32) -> (i32, i32) {
    %c0_i32 = arith.constant 0 : i32
    %c0_i32_0 = arith.constant 0 : i32
    %c0_i32_1 = arith.constant 0 : i32
    return %c0_i32, %c0_i32_0 : i32, i32
  }
  func.func @transform_3(%arg0: i32) -> (i32, i32) {
    %c0_i32 = arith.constant 0 : i32
    %c0_i32_0 = arith.constant 0 : i32
    %c0_i32_1 = arith.constant 0 : i32
    return %c0_i32, %c0_i32_0 : i32, i32
  }
  func.func @transform_4(%arg0: i32) -> (i32, i32) {
    %c0_i32 = arith.constant 0 : i32
    %c0_i32_0 = arith.constant 0 : i32
    %c0_i32_1 = arith.constant 0 : i32
    return %c0_i32, %c0_i32_0 : i32, i32
  }
  func.func @transform_5(%arg0: i32) -> (i32, i32) {
    %c0_i32 = arith.constant 0 : i32
    %c0_i32_0 = arith.constant 0 : i32
    %c0_i32_1 = arith.constant 0 : i32
    return %c0_i32, %c0_i32_0 : i32, i32
  }
  func.func @transform_6(%arg0: i32) -> i32 {
    %c0_i32 = arith.constant 0 : i32
    %c0_i32_0 = arith.constant 0 : i32
    return %c0_i32 : i32
  }
  func.func @transform_7(%arg0: i32) -> (i32, i32) {
    %c0_i32 = arith.constant 0 : i32
    %c0_i32_0 = arith.constant 0 : i32
    return %c0_i32, %arg0 : i32, i32
  }
}

</mosaic_0001>

<llo_original>
// kernel: critic_forward.1
$region0: #{critic_forward.1}
  #allocation0 [shape = 'u32[]', space=smem, size = 0x4, offset = 0x4, fixed_abs, tag = 'smem constant byte address 0x4 - core index']
  #allocation1 [shape = 'u32[144,128]{1,0:T(1,128)}', space=vmem, size = 0x12000, scoped, tag = 'internal scratch']
  #allocation2 [shape = 'f32[1]{0:T(128)S(6)}', space=smem, size = 0x200, scoped, tag = 'scoped memory for critic_forward.1']
  %s0 = inlined_call_operand.vmem [shape: bf16[32,512], index: 0, kind: input, shape index: {}]
  %s1 = inlined_call_operand.vmem [shape: bf16[64,32], index: 1, kind: input, shape index: {}]
  %s2 = inlined_call_operand.vmem [shape: f32[64,1], index: 2, kind: input, shape index: {}]
  %s3 = inlined_call_operand.vmem [shape: bf16[64,64], index: 3, kind: input, shape index: {}]
  %s4 = inlined_call_operand.vmem [shape: f32[64,1], index: 4, kind: input, shape index: {}]
  %s5 = inlined_call_operand.vmem [shape: f32[64,1], index: 5, kind: input, shape index: {}]
  %s6 = inlined_call_operand.<no memory space> [shape: f32[1], index: 6, kind: input, shape index: {}]
  %s7 = inlined_call_operand.hbm [shape: f32[1,512], index: 7, kind: output, shape index: {}]
  %s8 = sld [smem:[#allocation0]]
  $region99: #{critic_forward.1} parent=0
    _
  %s10 = ssub.s32 1, %s8
  %s11 = scalar_select 0, %s10, %s8
  %12 = sst [smem:[#allocation2]] %s6
  $region1: #{critic_forward.1} parent=0
    #allocation3 [shape = 'u8[32768]{0}', space=vmem, size = 0x8000, scoped, tag = 'input window, operand 0']
    #allocation4 [shape = 'u8[2048]{0}', space=vmem, size = 0x800, scoped, tag = 'output window, operand 0']
    #allocation5 [shape = 's32[2]{0}', space=sflag, size = 0x8, scoped, tag = 'scoped memory for critic_forward.1']
    %13 = vsyncpa [#allocation5], 0
    %s14 = scalar_lea.sflag [#allocation5], 1
    %15 = vsyncpa %s14, 0
    loop: start=0, step=1, limit=4
    $region2: #{critic_forward.1} parent=1 // loop_pre_header
      _
    $region3: #{critic_forward.1} parent=1 // loop_header
      %s17 = sphi 0, %s21
      %p18 = scmp.ge.s32.totalorder %s17, 4
      %s27 = sphi 0, %s29
      %s30 = sphi 0, %s27
      %s31 = sphi 0, %s30
      %s47 = sphi 0, %s31
      %s51 = sphi 0, %s51
      %s53 = sphi 0, %s51
      %s54 = sphi 0, %s53
      %s68 = sphi 0, %s54
      %s72 = sphi 0, %s72
      %s74 = sphi 0, %s72
      %s75 = sphi 0, %s74
      %s89 = sphi 0, %s75
      %s93 = sphi 0, %s93
      %s95 = sphi 0, %s93
      %s96 = sphi 0, %s95
      %s110 = sphi 0, %s96
      %s114 = sphi 0, %s114
      %s116 = sphi 0, %s114
      %s117 = sphi 0, %s116
      %s131 = sphi 0, %s117
      %s135 = sphi 0, %s135
      %s137 = sphi 0, %s135
      %s138 = sphi 0, %s137
      %s152 = sphi 0, %s138
      %s156 = sphi 0, %s156
      %s158 = sphi 0, %s156
      %s159 = sphi 0, %s158
      %s173 = sphi 0, %s159
      %s179 = sphi 0, %s181
      %s182 = sphi 0, %s179
      %s183 = sphi 0, %s182
      %s199 = sphi 0, %s183
    $region4: #{critic_forward.1} parent=1 // loop_header_branch
      %20 = sbr.rel (%p18) target = $region8
    $region5: #{critic_forward.1} parent=1 // loop_body
      %s22 = ssub.s32 %s17, 1
      %s23 = ssub.s32 %s17, 2
      %s24 = sadd.s32 %s17, 1
      %s25 = ssub.s32 %s17, %s24
      %p26 = scmp.eq.s32.totalorder %s25, 0
      %s28 = sadd.s32 %s27, 1
      %s29 = scalar_select %p26, %s27, %s28
      %p32 = pneg %p26
      %p33 = scmp.eq.s32.totalorder %s17, 1
      %p34 = por %p32, %p33
      %p35 = scmp.ne.s32.totalorder %s27, %s30
      %p36 = scmp.eq.s32.totalorder %s17, 0
      %p37 = por %p35, %p36
      %p38 = scmp.ne.s32.totalorder %s27, %s30
      %p39 = scmp.eq.s32.totalorder %s22, 1
      %p40 = por %p38, %p39
      %p41 = scmp.ne.s32.totalorder %s30, %s31
      %p42 = scmp.eq.s32.totalorder %s22, 0
      %p43 = por %p41, %p42
      %p44 = scmp.ne.s32.totalorder %s30, %s31
      %p45 = scmp.eq.s32.totalorder %s23, 1
      %p46 = por %p44, %p45
      %p48 = scmp.ne.s32.totalorder %s31, %s47
      %p49 = scmp.eq.s32.totalorder %s23, 0
      %p50 = por %p48, %p49
      %s52 = sadd.s32 %s51, 1
      %p55 = scmp.eq.s32.totalorder %s17, 1
      %p56 = scmp.ne.s32.totalorder %s51, %s53
      %p57 = scmp.eq.s32.totalorder %s17, 0
      %p58 = por %p56, %p57
      %p59 = scmp.ne.s32.totalorder %s51, %s53
      %p60 = scmp.eq.s32.totalorder %s22, 1
      %p61 = por %p59, %p60
      %p62 = scmp.ne.s32.totalorder %s53, %s54
      %p63 = scmp.eq.s32.totalorder %s22, 0
      %p64 = por %p62, %p63
      %p65 = scmp.ne.s32.totalorder %s53, %s54
      %p66 = scmp.eq.s32.totalorder %s23, 1
      %p67 = por %p65, %p66
      %p69 = scmp.ne.s32.totalorder %s54, %s68
      %p70 = scmp.eq.s32.totalorder %s23, 0
      %p71 = por %p69, %p70
      %s73 = sadd.s32 %s72, 1
      %p76 = scmp.eq.s32.totalorder %s17, 1
      %p77 = scmp.ne.s32.totalorder %s72, %s74
      %p78 = scmp.eq.s32.totalorder %s17, 0
      %p79 = por %p77, %p78
      %p80 = scmp.ne.s32.totalorder %s72, %s74
      %p81 = scmp.eq.s32.totalorder %s22, 1
      %p82 = por %p80, %p81
      %p83 = scmp.ne.s32.totalorder %s74, %s75
      %p84 = scmp.eq.s32.totalorder %s22, 0
      %p85 = por %p83, %p84
      %p86 = scmp.ne.s32.totalorder %s74, %s75
      %p87 = scmp.eq.s32.totalorder %s23, 1
      %p88 = por %p86, %p87
      %p90 = scmp.ne.s32.totalorder %s75, %s89
      %p91 = scmp.eq.s32.totalorder %s23, 0
      %p92 = por %p90, %p91
      %s94 = sadd.s32 %s93, 1
      %p97 = scmp.eq.s32.totalorder %s17, 1
      %p98 = scmp.ne.s32.totalorder %s93, %s95
      %p99 = scmp.eq.s32.totalorder %s17, 0
      %p100 = por %p98, %p99
      %p101 = scmp.ne.s32.totalorder %s93, %s95
      %p102 = scmp.eq.s32.totalorder %s22, 1
      %p103 = por %p101, %p102
      %p104 = scmp.ne.s32.totalorder %s95, %s96
      %p105 = scmp.eq.s32.totalorder %s22, 0
      %p106 = por %p104, %p105
      %p107 = scmp.ne.s32.totalorder %s95, %s96
      %p108 = scmp.eq.s32.totalorder %s23, 1
      %p109 = por %p107, %p108
      %p111 = scmp.ne.s32.totalorder %s96, %s110
      %p112 = scmp.eq.s32.totalorder %s23, 0
      %p113 = por %p111, %p112
      %s115 = sadd.s32 %s114, 1
      %p118 = scmp.eq.s32.totalorder %s17, 1
      %p119 = scmp.ne.s32.totalorder %s114, %s116
      %p120 = scmp.eq.s32.totalorder %s17, 0
      %p121 = por %p119, %p120
      %p122 = scmp.ne.s32.totalorder %s114, %s116
      %p123 = scmp.eq.s32.totalorder %s22, 1
      %p124 = por %p122, %p123
      %p125 = scmp.ne.s32.totalorder %s116, %s117
      %p126 = scmp.eq.s32.totalorder %s22, 0
      %p127 = por %p125, %p126
      %p128 = scmp.ne.s32.totalorder %s116, %s117
      %p129 = scmp.eq.s32.totalorder %s23, 1
      %p130 = por %p128, %p129
      %p132 = scmp.ne.s32.totalorder %s117, %s131
      %p133 = scmp.eq.s32.totalorder %s23, 0
      %p134 = por %p132, %p133
      %s136 = sadd.s32 %s135, 1
      %p139 = scmp.eq.s32.totalorder %s17, 1
      %p140 = scmp.ne.s32.totalorder %s135, %s137
      %p141 = scmp.eq.s32.totalorder %s17, 0
      %p142 = por %p140, %p141
      %p143 = scmp.ne.s32.totalorder %s135, %s137
      %p144 = scmp.eq.s32.totalorder %s22, 1
      %p145 = por %p143, %p144
      %p146 = scmp.ne.s32.totalorder %s137, %s138
      %p147 = scmp.eq.s32.totalorder %s22, 0
      %p148 = por %p146, %p147
      %p149 = scmp.ne.s32.totalorder %s137, %s138
      %p150 = scmp.eq.s32.totalorder %s23, 1
      %p151 = por %p149, %p150
      %p153 = scmp.ne.s32.totalorder %s138, %s152
      %p154 = scmp.eq.s32.totalorder %s23, 0
      %p155 = por %p153, %p154
      %s157 = sadd.s32 %s156, 1
      %p160 = scmp.eq.s32.totalorder %s17, 1
      %p161 = scmp.ne.s32.totalorder %s156, %s158
      %p162 = scmp.eq.s32.totalorder %s17, 0
      %p163 = por %p161, %p162
      %p164 = scmp.ne.s32.totalorder %s156, %s158
      %p165 = scmp.eq.s32.totalorder %s22, 1
      %p166 = por %p164, %p165
      %p167 = scmp.ne.s32.totalorder %s158, %s159
      %p168 = scmp.eq.s32.totalorder %s22, 0
      %p169 = por %p167, %p168
      %p170 = scmp.ne.s32.totalorder %s158, %s159
      %p171 = scmp.eq.s32.totalorder %s23, 1
      %p172 = por %p170, %p171
      %p174 = scmp.ne.s32.totalorder %s159, %s173
      %p175 = scmp.eq.s32.totalorder %s23, 0
      %p176 = por %p174, %p175
      %s177 = ssub.s32 %s17, %s24
      %p178 = scmp.eq.s32.totalorder %s177, 0
      %s180 = sadd.s32 %s179, 1
      %s181 = scalar_select %p178, %s179, %s180
      %p184 = pneg %p178
      %p185 = scmp.eq.s32.totalorder %s17, 1
      %p186 = por %p184, %p185
      %p187 = scmp.ne.s32.totalorder %s179, %s182
      %p188 = scmp.eq.s32.totalorder %s17, 0
      %p189 = por %p187, %p188
      %p190 = scmp.ne.s32.totalorder %s179, %s182
      %p191 = scmp.eq.s32.totalorder %s22, 1
      %p192 = por %p190, %p191
      %p193 = scmp.ne.s32.totalorder %s182, %s183
      %p194 = scmp.eq.s32.totalorder %s22, 0
      %p195 = por %p193, %p194
      %p196 = scmp.ne.s32.totalorder %s182, %s183
      %p197 = scmp.eq.s32.totalorder %s23, 1
      %p198 = por %p196, %p197
      %p200 = scmp.ne.s32.totalorder %s183, %s199
      %p201 = scmp.eq.s32.totalorder %s23, 0
      %p202 = por %p200, %p201
      %p203 = scmp.le.s32.totalorder 1, %s17
      %p204 = scmp.lt.s32.totalorder %s17, 3
      %p205 = pnand %p203, %p204
      %p206 = pneg %p205
      // Predicated region
      $region9: #{critic_forward.1} parent=5 // pred_check
        _
      $region10: #{critic_forward.1} parent=5 // pred_check_branch
        %208 = sbr.rel (%p205) target = $region12
      $region11: #{critic_forward.1} parent=5 // pred_region
        %s209 = ssub.s32 %s17, 1
        // Predicated region
        $region13: #{critic_forward.1} parent=11 // pred_check
          %p210 = pneg %p64
        $region14: #{critic_forward.1} parent=11 // pred_check_branch
          %212 = sbr.rel (%p210) target = $region16
        $region15: #{critic_forward.1} parent=11 // pred_region
          _
        $region16: #{critic_forward.1} parent=11 // pred_fallthru
          _
        // Predicated region
        $region17: #{critic_forward.1} parent=11 // pred_check
          %p213 = pneg %p85
        $region18: #{critic_forward.1} parent=11 // pred_check_branch
          %215 = sbr.rel (%p213) target = $region20
        $region19: #{critic_forward.1} parent=11 // pred_region
          _
        $region20: #{critic_forward.1} parent=11 // pred_fallthru
          _
        // Predicated region
        $region21: #{critic_forward.1} parent=11 // pred_check
          %p216 = pneg %p106
        $region22: #{critic_forward.1} parent=11 // pred_check_branch
          %218 = sbr.rel (%p216) target = $region24
        $region23: #{critic_forward.1} parent=11 // pred_region
          _
        $region24: #{critic_forward.1} parent=11 // pred_fallthru
          _
        // Predicated region
        $region25: #{critic_forward.1} parent=11 // pred_check
          %p219 = pneg %p127
        $region26: #{critic_forward.1} parent=11 // pred_check_branch
          %221 = sbr.rel (%p219) target = $region28
        $region27: #{critic_forward.1} parent=11 // pred_region
          _
        $region28: #{critic_forward.1} parent=11 // pred_fallthru
          _
        // Predicated region
        $region29: #{critic_forward.1} parent=11 // pred_check
          %p222 = pneg %p148
        $region30: #{critic_forward.1} parent=11 // pred_check_branch
          %224 = sbr.rel (%p222) target = $region32
        $region31: #{critic_forward.1} parent=11 // pred_region
          _
        $region32: #{critic_forward.1} parent=11 // pred_fallthru
          _
        // Predicated region
        $region33: #{critic_forward.1} parent=11 // pred_check
          %p225 = pneg %p169
        $region34: #{critic_forward.1} parent=11 // pred_check_branch
          %227 = sbr.rel (%p225) target = $region36
        $region35: #{critic_forward.1} parent=11 // pred_region
          _
        $region36: #{critic_forward.1} parent=11 // pred_fallthru
          _
      $region12: #{critic_forward.1} parent=5 // pred_fallthru
        _
      %p228 = scmp.lt.s32.totalorder %s17, 2
      // Predicated region
      $region37: #{critic_forward.1} parent=5 // pred_check
        %p229 = pneg %p228
      $region38: #{critic_forward.1} parent=5 // pred_check_branch
        %231 = sbr.rel (%p229) target = $region40
      $region39: #{critic_forward.1} parent=5 // pred_region
        // Predicated region
        $region41: #{critic_forward.1} parent=39 // pred_check
          %p232 = pneg %p37
        $region42: #{critic_forward.1} parent=39 // pred_check_branch
          %234 = sbr.rel (%p232) target = $region44
        $region43: #{critic_forward.1} parent=39 // pred_region
          %s235 = sand.u32 %s27, 1
          %s236 = sand.u32 %s27, 1
          %s237 = smul.addr %s236, 32
          %s238 = scalar_lea.vmem [#allocation3], %s237
          %s239 = smul.u32 2, %s17
          %s240 = smul.addr %s239, 4
          %s241 = scalar_lea.vmem %s0, %s240
          // Predicated region
          $region45: #{critic_forward.1} parent=43 // pred_check
            _
          $region46: #{critic_forward.1} parent=43 // pred_check_branch
            %243 = sbr.rel (0) target = $region48
          $region47: #{critic_forward.1} parent=43 // pred_region
            // Predicated region
            $region49: #{critic_forward.1} parent=47 // pred_check
              _
            $region50: #{critic_forward.1} parent=47 // pred_check_branch
              %245 = sbr.rel (0) target = $region52
            $region51: #{critic_forward.1} parent=47 // pred_region
              // Predicated region
              $region64: #{critic_forward.1} parent=51 // pred_check
                _
              $region65: #{critic_forward.1} parent=51 // pred_check_branch
                %267 = sbr.rel (0) target = $region67
              $region66: #{critic_forward.1} parent=51 // pred_region
                loop: start=0, step=1, limit=1
                $region68: #{critic_forward.1} parent=66 // loop_pre_header
                  _
                $region69: #{critic_forward.1} parent=66 // loop_header
                  %s269 = sphi 0, %s273
                  %p270 = scmp.ge.s32.totalorder %s269, 1
                  %s274 = sphi %s241, %s241
                  %s275 = sphi %s238, %s238
                $region70: #{critic_forward.1} parent=66 // loop_header_branch
                  %272 = sbr.rel (%p270) target = $region74
                $region71: #{critic_forward.1} parent=66 // loop_body
                  %v276 = vld [vmem:[%s274] sm:$0xff]
                  %277 = vst [vmem:[%s275] sm:$0xff] %v276
                  %v278 = vld [vmem:[%s274 + $0x10] sm:$0xff]
                  %279 = vst [vmem:[%s275 + $0x8] sm:$0xff] %v278
                  %v280 = vld [vmem:[%s274 + $0x20] sm:$0xff]
                  %281 = vst [vmem:[%s275 + $0x10] sm:$0xff] %v280
                  %v282 = vld [vmem:[%s274 + $0x30] sm:$0xff]
                  %283 = vst [vmem:[%s275 + $0x18] sm:$0xff] %v282
                $region72: #{critic_forward.1} parent=66 // loop_footer
                  %s273 = sadd.s32 1, %s269
                $region73: #{critic_forward.1} parent=66 // loop_footer_branch
                  %268 = sbr.rel target = $region69
                $region74: #{critic_forward.1} parent=66 // loop_exit
                  _
              $region67: #{critic_forward.1} parent=51 // pred_fallthru
                _
              // Predicated region
              $region75: #{critic_forward.1} parent=51 // pred_check
                _
              $region76: #{critic_forward.1} parent=51 // pred_check_branch
                %285 = sbr.rel target = $region78
              $region77: #{critic_forward.1} parent=51 // pred_region
                _
              $region78: #{critic_forward.1} parent=51 // pred_fallthru
                _
            $region52: #{critic_forward.1} parent=47 // pred_fallthru
              _
            // Predicated region
            $region53: #{critic_forward.1} parent=47 // pred_check
              _
            $region54: #{critic_forward.1} parent=47 // pred_check_branch
              %247 = sbr.rel target = $region56
            $region55: #{critic_forward.1} parent=47 // pred_region
              %s249 = ssub.s32 256, 1
              loop: start=0, step=1, limit=1
              $region57: #{critic_forward.1} parent=55 // loop_pre_header
                _
              $region58: #{critic_forward.1} parent=55 // loop_header
                %s251 = sphi 0, %s255
                %p252 = scmp.ge.s32.totalorder %s251, 1
                %s256 = sphi %s241, %s241
                %s257 = sphi %s238, %s238
              $region59: #{critic_forward.1} parent=55 // loop_header_branch
                %254 = sbr.rel (%p252) target = $region63
              $region60: #{critic_forward.1} parent=55 // loop_body
                %v258 = vld [vmem:[%s256] sm:%s249]
                %259 = vst [vmem:[%s257] sm:%s249] %v258
                %v260 = vld [vmem:[%s256 + $0x10] sm:%s249]
                %261 = vst [vmem:[%s257 + $0x8] sm:%s249] %v260
                %v262 = vld [vmem:[%s256 + $0x20] sm:%s249]
                %263 = vst [vmem:[%s257 + $0x10] sm:%s249] %v262
                %v264 = vld [vmem:[%s256 + $0x30] sm:%s249]
                %265 = vst [vmem:[%s257 + $0x18] sm:%s249] %v264
              $region61: #{critic_forward.1} parent=55 // loop_footer
                %s255 = sadd.s32 1, %s251
              $region62: #{critic_forward.1} parent=55 // loop_footer_branch
                %250 = sbr.rel target = $region58
              $region63: #{critic_forward.1} parent=55 // loop_exit
                _
            $region56: #{critic_forward.1} parent=47 // pred_fallthru
              _
          $region48: #{critic_forward.1} parent=43 // pred_fallthru
            _
          %286 = vnop
        $region44: #{critic_forward.1} parent=39 // pred_fallthru
          _
      $region40: #{critic_forward.1} parent=5 // pred_fallthru
        _
      %p287 = scmp.le.s32.totalorder 1, %s17
      %p288 = scmp.lt.s32.totalorder %s17, 3
      %p289 = pnand %p287, %p288
      %p290 = pneg %p289
      // Predicated region
      $region79: #{critic_forward.1} parent=5 // pred_check
        _
      $region80: #{critic_forward.1} parent=5 // pred_check_branch
        %292 = sbr.rel (%p289) target = $region82
      $region81: #{critic_forward.1} parent=5 // pred_region
        %s293 = ssub.s32 %s17, 1
        %s294 = sand.u32 %s30, 1
        %s295 = sand.u32 %s30, 1
        %s296 = smul.addr %s295, 32
        %s297 = scalar_lea.vmem [#allocation3], %s296
        // Predicated region
        $region83: #{critic_forward.1} parent=81 // pred_check
          %p298 = pneg %p43
        $region84: #{critic_forward.1} parent=81 // pred_check_branch
          %300 = sbr.rel (%p298) target = $region86
        $region85: #{critic_forward.1} parent=81 // pred_region
          _
        $region86: #{critic_forward.1} parent=81 // pred_fallthru
          _
        %s301 = sand.u32 %s30, 1
        %s302 = sand.u32 %s30, 1
        %s303 = smul.addr %s302, 32
        %s304 = scalar_lea.vmem [#allocation3], %s303
        %p305 = pneg %p43
        %p306 = pneg %p40
        %p307 = pneg %p64
        %p308 = pneg %p61
        %p309 = pneg %p85
        %p310 = pneg %p82
        %p311 = pneg %p106
        %p312 = pneg %p103
        %p313 = pneg %p127
        %p314 = pneg %p124
        %p315 = pneg %p148
        %p316 = pneg %p145
        %p317 = pneg %p169
        %p318 = pneg %p166
        %p319 = pneg %p195
        %p320 = pneg %p192
        %s321 = sand.u32 %s182, 1
        %s322 = scalar_lea.sflag [#allocation5], %s321
        %s323 = sand.u32 %s182, 1
        %s324 = smul.addr %s323, 2
        %s325 = scalar_lea.vmem [#allocation4], %s324
        %s326 = smul.u32 2, %s22
        %s327 = smul.u32 2, %s22
        %v329 = vld [vmem:[%s297] sm:$0xff]
        %v330 = vld [vmem:[%s297 + $0x8] sm:$0xff]
        %v331 = vld [vmem:[%s297 + $0x10] sm:$0xff]
        %v332 = vld [vmem:[%s297 + $0x18] sm:$0xff]
        %v333 = vld [vmem:[%s1] sm:$0xf]
        %v334 = vld [vmem:[%s1 + $0x4] sm:$0xf]
        %v335 = vld [vmem:[%s1 + $0x8] sm:$0xf]
        %v336 = vld [vmem:[%s1 + $0xc] sm:$0xf]
        %v337 = vld [vmem:[%s1 + $0x10] sm:$0xf]
        %v338 = vld [vmem:[%s1 + $0x14] sm:$0xf]
        %v339 = vld [vmem:[%s1 + $0x18] sm:$0xf]
        %v340 = vld [vmem:[%s1 + $0x1c] sm:$0xf]
        %v341 = vld [vmem:[%s2] sm:$0xff]
        %v342 = vld [vmem:[%s2 + $0x8] sm:$0xff]
        %v343 = vld [vmem:[%s2 + $0x10] sm:$0xff]
        %v344 = vld [vmem:[%s2 + $0x18] sm:$0xff]
        %v345 = vld [vmem:[%s2 + $0x20] sm:$0xff]
        %v346 = vld [vmem:[%s2 + $0x28] sm:$0xff]
        %v347 = vld [vmem:[%s2 + $0x30] sm:$0xff]
        %v348 = vld [vmem:[%s2 + $0x38] sm:$0xff]
        %350 = vset.pattern.permute.xlu0 0
        %351 = vperm.xlu0 %350, %v341
        %v352 = vpop.permute.xlu0 %351
        %355 = vset.pattern.permute.xlu0 0
        %356 = vperm.xlu0 %355, %v342
        %v357 = vpop.permute.xlu0 %356
        %360 = vset.pattern.permute.xlu0 0
        %361 = vperm.xlu0 %360, %v343
        %v362 = vpop.permute.xlu0 %361
        %365 = vset.pattern.permute.xlu0 0
        %366 = vperm.xlu0 %365, %v344
        %v367 = vpop.permute.xlu0 %366
        %370 = vset.pattern.permute.xlu0 0
        %371 = vperm.xlu0 %370, %v345
        %v372 = vpop.permute.xlu0 %371
        %375 = vset.pattern.permute.xlu0 0
        %376 = vperm.xlu0 %375, %v346
        %v377 = vpop.permute.xlu0 %376
        %380 = vset.pattern.permute.xlu0 0
        %381 = vperm.xlu0 %380, %v347
        %v382 = vpop.permute.xlu0 %381
        %385 = vset.pattern.permute.xlu0 0
        %386 = vperm.xlu0 %385, %v348
        %v387 = vpop.permute.xlu0 %386
        %v397 = vunpack.c.l.b16 %v333
        %v398 = vunpack.c.l.b16 %v334
        %v399 = vunpack.c.l.b16 %v335
        %v400 = vunpack.c.l.b16 %v336
        %v401 = vunpack.c.l.b16 %v337
        %v402 = vunpack.c.l.b16 %v338
        %v403 = vunpack.c.l.b16 %v339
        %v404 = vunpack.c.l.b16 %v340
        %v405 = vpack.c.b16 %v398, %v397
        %v406 = vpack.c.b16 %v400, %v399
        %v407 = vpack.c.b16 %v402, %v401
        %v408 = vpack.c.b16 %v404, %v403
        %v413 = vunpack.c.l.b16 %v329
        %v414 = vunpack.c.h.b16 %v329
        %v415 = vunpack.c.l.b16 %v330
        %v416 = vunpack.c.h.b16 %v330
        %v417 = vunpack.c.l.b16 %v331
        %v418 = vunpack.c.h.b16 %v331
        %v419 = vunpack.c.l.b16 %v332
        %v420 = vunpack.c.h.b16 %v332
        %v421 = vpack.c.b16 %v415, %v413
        %v422 = vpack.c.b16 %v416, %v414
        %v423 = vpack.c.b16 %v419, %v417
        %v424 = vpack.c.b16 %v420, %v418
        %vm429 = vcmask 261120
        %v431 = vsel %vm429, %v405, 0
        %v434 = vsel %vm429, %v406, 0
        %v437 = vsel %vm429, %v407, 0
        %v440 = vsel %vm429, %v408, 0
        %442 = vmatprep.subr.bf16.mxu0 0
        %443 = vmatpush1.bf16.msra.mxu0 0
        %444 = vmatprep.subr.bf16.mxu0 0
        %445 = vmatpush1.bf16.msra.mxu0 0
        %446 = vmatprep.subr.bf16.mxu0 0
        %447 = vmatpush1.bf16.msra.mxu0 0
        %448 = vmatprep.subr.bf16.mxu0 0
        %449 = vmatpush1.bf16.msra.mxu0 0
        %450 = vmatprep.subr.bf16.mxu0 0
        %451 = vmatpush1.bf16.msra.mxu0 0
        %452 = vmatprep.subr.bf16.mxu0 0
        %453 = vmatpush1.bf16.msra.mxu0 0
        %454 = vmatprep.subr.bf16.mxu0 %v424
        %455 = vmatpush1.bf16.msra.mxu0 %v423
        %456 = vmatprep.subr.bf16.mxu0 %v422
        %457 = vmatpush1.bf16.msra.mxu0 %v421
        %458 = vmatprep.subr.bf16.mxu0 0
        %459 = vmatpush2.bf16.msra.mxu0 0
        %460 = vmatprep.subr.bf16.mxu0 0
        %461 = vmatpush2.bf16.msra.mxu0 0
        %462 = vmatprep.subr.bf16.mxu0 0
        %463 = vmatpush2.bf16.msra.mxu0 0
        %464 = vmatprep.subr.bf16.mxu0 0
        %465 = vmatpush2.bf16.msra.mxu0 0
        %466 = vmatprep.subr.bf16.mxu0 0
        %467 = vmatpush2.bf16.msra.mxu0 0
        %468 = vmatprep.subr.bf16.mxu0 0
        %469 = vmatpush2.bf16.msra.mxu0 0
        %470 = vmatprep.subr.bf16.mxu0 0
        %471 = vmatpush2.bf16.msra.mxu0 0
        %472 = vmatprep.subr.bf16.mxu0 0
        %473 = vmatpush2.bf16.msra.mxu0 0
        %474 = vmatprep.mubr.bf16.mxu0 0
        %475 = vmatmul.mubr.bf16.gmra.mxu0 %v431
        %v476 = vpop.f32.mrf.mxu0
        %v477 = vadd.f32 %v352, %v476
        %v478 = vpop.f32.mrf.mxu0
        %v479 = vadd.f32 %v352, %v478
        %v480 = vpop.f32.mrf.mxu0
        %v481 = vadd.f32 %v357, %v480
        %v482 = vpop.f32.mrf.mxu0
        %v483 = vadd.f32 %v357, %v482
        %484 = vmatprep.mubr.bf16.mxu0 0
        %485 = vmatmul.mubr.bf16.gmra.mxu0 %v434
        %v486 = vpop.f32.mrf.mxu0
        %v487 = vadd.f32 %v362, %v486
        %v488 = vpop.f32.mrf.mxu0
        %v489 = vadd.f32 %v362, %v488
        %v490 = vpop.f32.mrf.mxu0
        %v491 = vadd.f32 %v367, %v490
        %v492 = vpop.f32.mrf.mxu0
        %v493 = vadd.f32 %v367, %v492
        %494 = vmatprep.mubr.bf16.mxu0 0
        %495 = vmatmul.mubr.bf16.gmra.mxu0 %v437
        %v496 = vpop.f32.mrf.mxu0
        %v497 = vadd.f32 %v372, %v496
        %v498 = vpop.f32.mrf.mxu0
        %v499 = vadd.f32 %v372, %v498
        %v500 = vpop.f32.mrf.mxu0
        %v501 = vadd.f32 %v377, %v500
        %v502 = vpop.f32.mrf.mxu0
        %v503 = vadd.f32 %v377, %v502
        %504 = vmatprep.mubr.bf16.mxu0 0
        %505 = vmatmul.mubr.bf16.gmra.mxu0 %v440
        %v506 = vpop.f32.mrf.mxu0
        %v507 = vadd.f32 %v382, %v506
        %v508 = vpop.f32.mrf.mxu0
        %v509 = vadd.f32 %v382, %v508
        %v510 = vpop.f32.mrf.mxu0
        %v511 = vadd.f32 %v387, %v510
        %v512 = vpop.f32.mrf.mxu0
        %v513 = vadd.f32 %v387, %v512
        %514 = vdwg.mxu0
        %v515 = vmax.f32 %v477, 0.0
        %v516 = vmax.f32 %v479, 0.0
        %v517 = vmax.f32 %v481, 0.0
        %v518 = vmax.f32 %v483, 0.0
        %v519 = vmax.f32 %v487, 0.0
        %v520 = vmax.f32 %v489, 0.0
        %v521 = vmax.f32 %v491, 0.0
        %v522 = vmax.f32 %v493, 0.0
        %v523 = vmax.f32 %v497, 0.0
        %v524 = vmax.f32 %v499, 0.0
        %v525 = vmax.f32 %v501, 0.0
        %v526 = vmax.f32 %v503, 0.0
        %v527 = vmax.f32 %v507, 0.0
        %v528 = vmax.f32 %v509, 0.0
        %v529 = vmax.f32 %v511, 0.0
        %v530 = vmax.f32 %v513, 0.0
        %v531 = vld [vmem:[%s3] sm:$0xf]
        %v532 = vld [vmem:[%s3 + $0x4] sm:$0xf]
        %v533 = vld [vmem:[%s3 + $0x8] sm:$0xf]
        %v534 = vld [vmem:[%s3 + $0xc] sm:$0xf]
        %v535 = vld [vmem:[%s3 + $0x10] sm:$0xf]
        %v536 = vld [vmem:[%s3 + $0x14] sm:$0xf]
        %v537 = vld [vmem:[%s3 + $0x18] sm:$0xf]
        %v538 = vld [vmem:[%s3 + $0x1c] sm:$0xf]
        %v539 = vpack.c.bf16 %v517, %v515
        %v540 = vpack.c.bf16 %v518, %v516
        %v541 = vpack.c.bf16 %v521, %v519
        %v542 = vpack.c.bf16 %v522, %v520
        %v543 = vpack.c.bf16 %v525, %v523
        %v544 = vpack.c.bf16 %v526, %v524
        %v545 = vpack.c.bf16 %v529, %v527
        %v546 = vpack.c.bf16 %v530, %v528
        %v547 = vld [vmem:[%s4] sm:$0xff]
        %v548 = vld [vmem:[%s4 + $0x8] sm:$0xff]
        %v549 = vld [vmem:[%s4 + $0x10] sm:$0xff]
        %v550 = vld [vmem:[%s4 + $0x18] sm:$0xff]
        %v551 = vld [vmem:[%s4 + $0x20] sm:$0xff]
        %v552 = vld [vmem:[%s4 + $0x28] sm:$0xff]
        %v553 = vld [vmem:[%s4 + $0x30] sm:$0xff]
        %v554 = vld [vmem:[%s4 + $0x38] sm:$0xff]
        %556 = vset.pattern.permute.xlu0 0
        %557 = vperm.xlu0 %556, %v547
        %v558 = vpop.permute.xlu0 %557
        %561 = vset.pattern.permute.xlu0 0
        %562 = vperm.xlu0 %561, %v548
        %v563 = vpop.permute.xlu0 %562
        %566 = vset.pattern.permute.xlu0 0
        %567 = vperm.xlu0 %566, %v549
        %v568 = vpop.permute.xlu0 %567
        %571 = vset.pattern.permute.xlu0 0
        %572 = vperm.xlu0 %571, %v550
        %v573 = vpop.permute.xlu0 %572
        %576 = vset.pattern.permute.xlu0 0
        %577 = vperm.xlu0 %576, %v551
        %v578 = vpop.permute.xlu0 %577
        %581 = vset.pattern.permute.xlu0 0
        %582 = vperm.xlu0 %581, %v552
        %v583 = vpop.permute.xlu0 %582
        %586 = vset.pattern.permute.xlu0 0
        %587 = vperm.xlu0 %586, %v553
        %v588 = vpop.permute.xlu0 %587
        %591 = vset.pattern.permute.xlu0 0
        %592 = vperm.xlu0 %591, %v554
        %v593 = vpop.permute.xlu0 %592
        %v603 = vunpack.c.l.b16 %v531
        %v604 = vunpack.c.l.b16 %v532
        %v605 = vunpack.c.l.b16 %v533
        %v606 = vunpack.c.l.b16 %v534
        %v607 = vunpack.c.l.b16 %v535
        %v608 = vunpack.c.l.b16 %v536
        %v609 = vunpack.c.l.b16 %v537
        %v610 = vunpack.c.l.b16 %v538
        %v611 = vpack.c.b16 %v604, %v603
        %v612 = vpack.c.b16 %v606, %v605
        %v613 = vpack.c.b16 %v608, %v607
        %v614 = vpack.c.b16 %v610, %v609
        %vm615 = vcmask 523264
        %v617 = vsel %vm615, %v611, 0
        %v620 = vsel %vm615, %v612, 0
        %v623 = vsel %vm615, %v613, 0
        %v626 = vsel %vm615, %v614, 0
        %628 = vmatprep.subr.bf16.mxu0 0
        %629 = vmatpush1.bf16.msra.mxu0 0
        %630 = vmatprep.subr.bf16.mxu0 0
        %631 = vmatpush1.bf16.msra.mxu0 0
        %632 = vmatprep.subr.bf16.mxu0 0
        %633 = vmatpush1.bf16.msra.mxu0 0
        %634 = vmatprep.subr.bf16.mxu0 0
        %635 = vmatpush1.bf16.msra.mxu0 0
        %636 = vmatprep.subr.bf16.mxu0 %v546
        %637 = vmatpush1.bf16.msra.mxu0 %v545
        %638 = vmatprep.subr.bf16.mxu0 %v544
        %639 = vmatpush1.bf16.msra.mxu0 %v543
        %640 = vmatprep.subr.bf16.mxu0 %v542
        %641 = vmatpush1.bf16.msra.mxu0 %v541
        %642 = vmatprep.subr.bf16.mxu0 %v540
        %643 = vmatpush1.bf16.msra.mxu0 %v539
        %644 = vmatprep.subr.bf16.mxu0 0
        %645 = vmatpush2.bf16.msra.mxu0 0
        %646 = vmatprep.subr.bf16.mxu0 0
        %647 = vmatpush2.bf16.msra.mxu0 0
        %648 = vmatprep.subr.bf16.mxu0 0
        %649 = vmatpush2.bf16.msra.mxu0 0
        %650 = vmatprep.subr.bf16.mxu0 0
        %651 = vmatpush2.bf16.msra.mxu0 0
        %652 = vmatprep.subr.bf16.mxu0 0
        %653 = vmatpush2.bf16.msra.mxu0 0
        %654 = vmatprep.subr.bf16.mxu0 0
        %655 = vmatpush2.bf16.msra.mxu0 0
        %656 = vmatprep.subr.bf16.mxu0 0
        %657 = vmatpush2.bf16.msra.mxu0 0
        %658 = vmatprep.subr.bf16.mxu0 0
        %659 = vmatpush2.bf16.msra.mxu0 0
        %660 = vmatprep.mubr.bf16.mxu0 0
        %661 = vmatmul.mubr.bf16.gmra.mxu0 %v617
        %v662 = vpop.f32.mrf.mxu0
        %v663 = vadd.f32 %v558, %v662
        %v664 = vpop.f32.mrf.mxu0
        %v665 = vadd.f32 %v558, %v664
        %v666 = vpop.f32.mrf.mxu0
        %v667 = vadd.f32 %v563, %v666
        %v668 = vpop.f32.mrf.mxu0
        %v669 = vadd.f32 %v563, %v668
        %670 = vmatprep.mubr.bf16.mxu0 0
        %671 = vmatmul.mubr.bf16.gmra.mxu0 %v620
        %v672 = vpop.f32.mrf.mxu0
        %v673 = vadd.f32 %v568, %v672
        %v674 = vpop.f32.mrf.mxu0
        %v675 = vadd.f32 %v568, %v674
        %v676 = vpop.f32.mrf.mxu0
        %v677 = vadd.f32 %v573, %v676
        %v678 = vpop.f32.mrf.mxu0
        %v679 = vadd.f32 %v573, %v678
        %680 = vmatprep.mubr.bf16.mxu0 0
        %681 = vmatmul.mubr.bf16.gmra.mxu0 %v623
        %v682 = vpop.f32.mrf.mxu0
        %v683 = vadd.f32 %v578, %v682
        %v684 = vpop.f32.mrf.mxu0
        %v685 = vadd.f32 %v578, %v684
        %v686 = vpop.f32.mrf.mxu0
        %v687 = vadd.f32 %v583, %v686
        %v688 = vpop.f32.mrf.mxu0
        %v689 = vadd.f32 %v583, %v688
        %690 = vmatprep.mubr.bf16.mxu0 0
        %691 = vmatmul.mubr.bf16.gmra.mxu0 %v626
        %v692 = vpop.f32.mrf.mxu0
        %v693 = vadd.f32 %v588, %v692
        %v694 = vpop.f32.mrf.mxu0
        %v695 = vadd.f32 %v588, %v694
        %v696 = vpop.f32.mrf.mxu0
        %v697 = vadd.f32 %v593, %v696
        %v698 = vpop.f32.mrf.mxu0
        %v699 = vadd.f32 %v593, %v698
        %700 = vdwg.mxu0
        %v701 = vmax.f32 %v663, 0.0
        %v702 = vmax.f32 %v665, 0.0
        %v703 = vmax.f32 %v667, 0.0
        %v704 = vmax.f32 %v669, 0.0
        %v705 = vmax.f32 %v673, 0.0
        %v706 = vmax.f32 %v675, 0.0
        %v707 = vmax.f32 %v677, 0.0
        %v708 = vmax.f32 %v679, 0.0
        %v709 = vmax.f32 %v683, 0.0
        %v710 = vmax.f32 %v685, 0.0
        %v711 = vmax.f32 %v687, 0.0
        %v712 = vmax.f32 %v689, 0.0
        %v713 = vmax.f32 %v693, 0.0
        %v714 = vmax.f32 %v695, 0.0
        %v715 = vmax.f32 %v697, 0.0
        %v716 = vmax.f32 %v699, 0.0
        %v717 = vld [vmem:[%s5] sm:$0xff]
        %v718 = vld [vmem:[%s5 + $0x8] sm:$0xff]
        %v719 = vld [vmem:[%s5 + $0x10] sm:$0xff]
        %v720 = vld [vmem:[%s5 + $0x18] sm:$0xff]
        %v721 = vld [vmem:[%s5 + $0x20] sm:$0xff]
        %v722 = vld [vmem:[%s5 + $0x28] sm:$0xff]
        %v723 = vld [vmem:[%s5 + $0x30] sm:$0xff]
        %v724 = vld [vmem:[%s5 + $0x38] sm:$0xff]
        %726 = vset.pattern.permute.xlu0 0
        %727 = vperm.xlu0 %726, %v717
        %v728 = vpop.permute.xlu0 %727
        %731 = vset.pattern.permute.xlu0 0
        %732 = vperm.xlu0 %731, %v718
        %v733 = vpop.permute.xlu0 %732
        %736 = vset.pattern.permute.xlu0 0
        %737 = vperm.xlu0 %736, %v719
        %v738 = vpop.permute.xlu0 %737
        %741 = vset.pattern.permute.xlu0 0
        %742 = vperm.xlu0 %741, %v720
        %v743 = vpop.permute.xlu0 %742
        %746 = vset.pattern.permute.xlu0 0
        %747 = vperm.xlu0 %746, %v721
        %v748 = vpop.permute.xlu0 %747
        %751 = vset.pattern.permute.xlu0 0
        %752 = vperm.xlu0 %751, %v722
        %v753 = vpop.permute.xlu0 %752
        %756 = vset.pattern.permute.xlu0 0
        %757 = vperm.xlu0 %756, %v723
        %v758 = vpop.permute.xlu0 %757
        %761 = vset.pattern.permute.xlu0 0
        %762 = vperm.xlu0 %761, %v724
        %v763 = vpop.permute.xlu0 %762
        %v765 = vmul.f32 %v701, %v728
        %v766 = vmul.f32 %v702, %v728
        %v767 = vmul.f32 %v703, %v733
        %v768 = vmul.f32 %v704, %v733
        %v769 = vmul.f32 %v705, %v738
        %v770 = vmul.f32 %v706, %v738
        %v771 = vmul.f32 %v707, %v743
        %v772 = vmul.f32 %v708, %v743
        %v773 = vmul.f32 %v709, %v748
        %v774 = vmul.f32 %v710, %v748
        %v775 = vmul.f32 %v711, %v753
        %v776 = vmul.f32 %v712, %v753
        %v777 = vmul.f32 %v713, %v758
        %v778 = vmul.f32 %v714, %v758
        %v779 = vmul.f32 %v715, %v763
        %v780 = vmul.f32 %v716, %v763
        %v781 = vadd.f32 %v765, %v767
        %v782 = vadd.f32 %v781, %v769
        %v783 = vadd.f32 %v782, %v771
        %v784 = vadd.f32 %v783, %v773
        %v785 = vadd.f32 %v784, %v775
        %v786 = vadd.f32 %v785, %v777
        %v787 = vadd.f32 %v786, %v779
        %v788 = vrot.slane %v787, 4
        %v789 = vadd.f32 %v787, %v788
        %v790 = vrot.slane %v789, 2
        %v791 = vadd.f32 %v789, %v790
        %v792 = vrot.slane %v791, 1
        %v793 = vadd.f32 %v791, %v792
        %v794 = vadd.f32 %v766, %v768
        %v795 = vadd.f32 %v794, %v770
        %v796 = vadd.f32 %v795, %v772
        %v797 = vadd.f32 %v796, %v774
        %v798 = vadd.f32 %v797, %v776
        %v799 = vadd.f32 %v798, %v778
        %v800 = vadd.f32 %v799, %v780
        %v801 = vrot.slane %v800, 4
        %v802 = vadd.f32 %v800, %v801
        %v803 = vrot.slane %v802, 2
        %v804 = vadd.f32 %v802, %v803
        %v805 = vrot.slane %v804, 1
        %v806 = vadd.f32 %v804, %v805
        %s807 = sld [smem:[#allocation2]]
        %v808 = vstv %s807
        %v809 = vadd.f32 %v793, %v808
        %v810 = vadd.f32 %v806, %v808
        %v813 = vcombine.low %v809, %v810
        %v815 = vunpack.c.l.s4 1966171168
        %v816 = vunpack.c.0.s8 %v815
        %v817 = vlaneseq
        %v818 = vshrl.u32 %v817, 7
        %v819 = vsub.s32 %v816, %v818
        %v820 = vrot.slane %v813, %v819
        %v822 = vunpack.c.l.s4 1966171168
        %v823 = vunpack.c.0.s8 %v822
        %v824 = vlaneseq
        %v825 = vshrl.u32 %v824, 7
        %v826 = vsub.s32 %v823, %v825
        %v827 = vrot.slane %v820, %v826
        %v829 = vlaneseq
        %vm830 = vcmp.ge.s32.totalorder %v829, 0
        %vm831 = vcmp.lt.s32.totalorder %v829, 256
        %vm832 = vmand %vm830, %vm831
        %833 = vst.msk [vmem:[%s325] sm:$0x3] %vm832, %v827
        %s834 = sand.u32 %s182, 1
        %s835 = scalar_lea.sflag [#allocation5], %s834
        %s836 = sand.u32 %s182, 1
        %s837 = smul.addr %s836, 2
        %s838 = scalar_lea.vmem [#allocation4], %s837
        // Predicated region
        $region87: #{critic_forward.1} parent=81 // pred_check
          %p839 = pneg %p192
        $region88: #{critic_forward.1} parent=81 // pred_check_branch
          %841 = sbr.rel (%p839) target = $region90
        $region89: #{critic_forward.1} parent=81 // pred_region
          %s842 = smul.u32 2, %s22
          %s844 = ssub.s32 32, 32
          %845 = vsyncadd %s835, %s844
          %s846 = smul.addr %s842, 16
          %s847 = scalar_lea.hbm %s7, %s846
          %s849 = sshll.u32 %s838, 4
          %s850 = int_to_ptr.vmem [resolvable:$true] %s849
          %852 = dma.vmem_to_hbm [thread:$0]  %s850, 32, %s847, %s835
        $region90: #{critic_forward.1} parent=81 // pred_fallthru
          _
      $region82: #{critic_forward.1} parent=5 // pred_fallthru
        _
      %p853 = scmp.le.s32.totalorder 2, %s17
      // Predicated region
      $region91: #{critic_forward.1} parent=5 // pred_check
        %p854 = pneg %p853
      $region92: #{critic_forward.1} parent=5 // pred_check_branch
        %856 = sbr.rel (%p854) target = $region94
      $region93: #{critic_forward.1} parent=5 // pred_region
        %s857 = ssub.s32 %s17, 2
        // Predicated region
        $region95: #{critic_forward.1} parent=93 // pred_check
          %p858 = pneg %p198
        $region96: #{critic_forward.1} parent=93 // pred_check_branch
          %860 = sbr.rel (%p858) target = $region98
        $region97: #{critic_forward.1} parent=93 // pred_region
          %s861 = sand.u32 %s183, 1
          %s862 = scalar_lea.sflag [#allocation5], %s861
          %s863 = sand.u32 %s183, 1
          %s864 = smul.addr %s863, 2
          %s865 = scalar_lea.vmem [#allocation4], %s864
          %866 = dma.done %s862, 32
        $region98: #{critic_forward.1} parent=93 // pred_fallthru
          _
      $region94: #{critic_forward.1} parent=5 // pred_fallthru
        _
    $region6: #{critic_forward.1} parent=1 // loop_footer
      %s21 = sadd.s32 1, %s17
    $region7: #{critic_forward.1} parent=1 // loop_footer_branch
      %16 = sbr.rel target = $region3
    $region8: #{critic_forward.1} parent=1 // loop_exit
      _
    %867 = vsyncpa [#allocation5], 1
    %s868 = scalar_lea.sflag [#allocation5], 1
    %869 = vsyncpa %s868, 1

</llo_original>
